<compile_context>
chip_gen: v7x
topology: tpu7x:2x2x1
jax: 0.10.0
libtpu: 0.0.40
codegen_flags: <defaults>
</compile_context>

<pallas_src>
import functools

import jax
import jax.numpy as jnp
from jax.experimental import pallas as pl
from jax.experimental.pallas import tpu as pltpu


def _input_fn_kernel(x_ref, y_ref, stats_ref):
    """One grid step = one batch element.

    x_ref     : (1, H*W, D)  input slab, channels-last (D on the lane axis)
    y_ref     : (1, D, H*W)  output slab, lane-dense (H*W on the lane axis)
    stats_ref : (1, 1, 2)    f32 per-batch [min, max] partials
    """
    xb = x_ref[0]                       # (H*W, D), input dtype (e.g. bf16)
    nch = xb.shape[-1]

    # BHWD -> BDHW reorder without materializing a padded f32 copy of the
    # channels-last tile and without a packed-type XLU transpose: contract an
    # exact identity against the channel axis on the MXU (bf16 x bf16 -> f32
    # accumulate).  yf[d, hw] = xb[hw, d], already in f32 (cast-after-reorder).
    rows = jax.lax.broadcasted_iota(jnp.int32, (nch, nch), 0)
    cols = jax.lax.broadcasted_iota(jnp.int32, (nch, nch), 1)
    eye = jnp.where(rows == cols, 1.0, 0.0).astype(xb.dtype)   # exact identity
    yf = jax.lax.dot_general(
        eye, xb,
        (((1,), (1,)), ((), ())),       # contract the channel axis of both
        preferred_element_type=jnp.float32,
    )                                   # (D, H*W) f32, lane-dense

    y_ref[0] = yf.astype(y_ref.dtype)

    # Fused range stats on the small lane-dense slab.  f32 reduce (required on
    # v5e's VPU); value-identical to reducing the raw input because the
    # widening cast commutes with min/max.
    mn_b = jnp.min(yf)
    mx_b = jnp.max(yf)
    sel = jax.lax.broadcasted_iota(jnp.int32, (1, 1, 2), 2)
    stats_ref[...] = jnp.where(sel == 0, mn_b, mx_b)   # [min, max], one store


def _input_transform_jnp(x, *, out_dtype=jnp.float32):
    """Plain-XLA fallback, recommended below a few hundred KiB (launch cost
    of a pallas_call exceeds the kernel's compute/DMA time at such sizes)."""
    xf = x.astype(jnp.float32)
    y = jnp.transpose(xf, (0, 3, 1, 2)).astype(out_dtype)
    return y, jnp.min(xf), jnp.max(xf)


def input_transform(x, *, out_dtype=jnp.float32, use_pallas=True):
    """Pallas-backed f(x): BHWD->BDHW reorder + cast + global min/max stats.

    Returns (y, mn, mx) as device arrays; no host sync happens here (range /
    size checks are deferred to `check_range_and_sizes`)."""
    assert x.ndim == 4, f"expected rank-4 BHWD input, got {x.shape}"
    B, H, W, D = x.shape

    if not use_pallas:
        return _input_transform_jnp(x, out_dtype=out_dtype)

    # Free wrapper-side views: the kernel consumes (H*W, D) slabs and emits
    # lane-dense (D, H*W) slabs (H*W multiple of 128 -> unmasked stores; other
    # shapes remain correct, just masked).  Lane-sparse input (tiny D on the
    # lane axis) is accepted for small channel counts per review.
    x2 = x.reshape(B, H * W, D)

    y2, stats = pl.pallas_call(
        _input_fn_kernel,
        out_shape=(
            jax.ShapeDtypeStruct((B, D, H * W), out_dtype),   # reordered + cast
            jax.ShapeDtypeStruct((B, 1, 2), jnp.float32),      # per-batch [min, max]
        ),
        grid_spec=pltpu.PrefetchScalarGridSpec(
            num_scalar_prefetch=0,
            grid=(B,),                                         # one batch elem / step
            in_specs=[
                pl.BlockSpec((1, H * W, D), lambda b: (b, 0, 0)),
            ],
            out_specs=(
                pl.BlockSpec((1, D, H * W), lambda b: (b, 0, 0)),
                pl.BlockSpec((1, 1, 2), lambda b: (b, 0, 0)),
            ),
        ),
        compiler_params=pltpu.CompilerParams(
            # Independent per-batch blocks (no carried state): TC sharding on
            # v7x, neutral on single-TC v5e/v6e.  Tiny per-step blocks, so the
            # default scoped-VMEM limit is ample even on v7x (64 MiB).
            dimension_semantics=("parallel",),
        ),
    )(x2)

    y = y2.reshape(B, D, H, W)        # free view of the lane-dense output
    mn = jnp.min(stats[:, 0, 0])      # combine per-batch partials (B values)
    mx = jnp.max(stats[:, 0, 1])
    return y, mn, mx


def check_range_and_sizes(mn, mx, y, value_range=(0.0, 1.0), sizes=None):
    """Host-side checks mirroring the PyTorch asserts.

    Deliberately separated from the forward call: float() forces a device->host
    sync, so callers can defer / batch / skip it instead of paying a blocking
    round-trip on every forward."""
    if value_range is not None:
        lo = float(mn)
        hi = float(mx)
        assert lo >= value_range[0] and hi <= value_range[1], (lo, hi, value_range)

    if sizes is not None:
        assert len(sizes) == y.ndim, (
            f"expected tensor of rank {len(sizes)}, got {y.ndim}"
        )
        for i, size in enumerate(sizes):
            if size is None:
                continue
            elif isinstance(size, int):
                assert y.shape[i] == size, (
                    f"dim {i}: expected {size}, got {y.shape[i]} ({y.shape})"
                )
            elif isinstance(size, (list, tuple)):
                s_lo, s_hi = size
                assert s_lo <= y.shape[i] <= s_hi, (
                    f"dim {i}: expected {(s_lo, s_hi)}, got {y.shape[i]}"
                )
            else:
                raise ValueError("bad size spec")


class Fun:
    """JAX/Pallas analogue of torchmore.layers.Fun_: wrap a callable as a layer."""

    def __init__(self, f, info=None):
        assert callable(f)
        self.f = f
        self.info = info

    def __call__(self, x):
        return self.f(x)

    forward = __call__

    def __repr__(self):
        return "Fun {} {}".format(self.info, self.f)


if __name__ == "__main__":
    key = jax.random.PRNGKey(0)
    B, H, W, D = 2, 16, 16, 4

    # Input in BHWD order, values in [0, 1); bf16 input exercises the cast.
    x = jax.random.uniform(key, (B, H, W, D), dtype=jnp.float32).astype(jnp.bfloat16)

    layer = Fun(
        functools.partial(input_transform, out_dtype=jnp.float32),
        info="Input(assume=BHWD, reorder=BDHW, range=(0,1), dtype=float32)",
    )

    y, mn, mx = layer.forward(x)
    y, mn, mx = jax.block_until_ready((y, mn, mx))

    # Deferred host-side checks (range + sizes), done once after the call.
    check_range_and_sizes(mn, mx, y, value_range=(0.0, 1.0), sizes=(B, D, H, W))

    # Pure-JAX reference of the forward pass (permute + cast + stats).
    y_ref = jnp.transpose(x.astype(jnp.float32), (0, 3, 1, 2))
    assert y.shape == (B, D, H, W) and y.dtype == jnp.float32
    assert bool(jnp.all(y == y_ref)), "kernel output mismatch vs reference"
    assert float(mn) == float(jnp.min(x.astype(jnp.float32)))
    assert float(mx) == float(jnp.max(x.astype(jnp.float32)))

    print("KERNEL_OK")
</pallas_src>

<mosaic_0001>
module attributes {stable_mosaic.version = 11 : i64} {
  func.func @_input_fn_kernel(%arg0: i32, %arg1: memref<1x256x4xbf16, #tpu.memory_space<vmem>>, %arg2: memref<1x4x256xf32, #tpu.memory_space<vmem>>, %arg3: memref<1x1x2xf32, #tpu.memory_space<vmem>>) attributes {dimension_semantics = [#tpu.dimension_semantics<parallel>], iteration_bounds = array<i64: 2>, scalar_prefetch = 0 : i64, scratch_operands = 0 : i64, tpu.core_type = #tpu.core_type<tc>, window_params = [{transform_indices = @transform_0, window_bounds = array<i64: 1, 256, 4>}, {transform_indices = @transform_1, window_bounds = array<i64: 1, 4, 256>}, {transform_indices = @transform_2, window_bounds = array<i64: 1, 1, 2>}]} {
    %c0 = arith.constant 0 : index
    %c0_0 = arith.constant 0 : index
    %c0_1 = arith.constant 0 : index
    %0 = vector.load %arg1[%c0, %c0_0, %c0_1] : memref<1x256x4xbf16, #tpu.memory_space<vmem>>, vector<1x256x4xbf16>
    %1 = vector.shape_cast %0 : vector<1x256x4xbf16> to vector<256x4xbf16>
    %2 = tpu.iota {dimensions = array<i32: 0>} : vector<4x4xi32>
    %3 = tpu.iota {dimensions = array<i32: 1>} : vector<4x4xi32>
    %4 = arith.cmpi eq, %2, %3 : vector<4x4xi32>
    %cst = arith.constant 1.000000e+00 : f32
    %cst_2 = arith.constant 0.000000e+00 : f32
    %5 = vector.broadcast %cst : f32 to vector<4x4xf32>
    %6 = vector.broadcast %cst_2 : f32 to vector<4x4xf32>
    %7 = arith.select %4, %5, %6 : vector<4x4xi1>, vector<4x4xf32>
    %8 = arith.truncf %7 : vector<4x4xf32> to vector<4x4xbf16>
    %cst_3 = arith.constant dense<0.000000e+00> : vector<4x256xf32>
    %9 = tpu.matmul %8, %1, %cst_3 {dimension_numbers = #tpu.dot_dimension_numbers<[1], [1], [0], [0], [0, 0, 1, 0], [], []>} : vector<4x4xbf16>, vector<256x4xbf16>, vector<4x256xf32> -> vector<4x256xf32>
    %c0_4 = arith.constant 0 : index
    %c0_5 = arith.constant 0 : index
    %c0_6 = arith.constant 0 : index
    %10 = vector.load %arg2[%c0_4, %c0_5, %c0_6] : memref<1x4x256xf32, #tpu.memory_space<vmem>>, vector<1x4x256xf32>
    %11 = vector.shape_cast %10 : vector<1x4x256xf32> to vector<4x256xf32>
    %12 = vector.shape_cast %9 : vector<4x256xf32> to vector<1x4x256xf32>
    tpu.vector_store %arg2[%c0_4, %c0_5, %c0_6], %12 {strides = array<i32>} : memref<1x4x256xf32, #tpu.memory_space<vmem>>, vector<1x4x256xf32>,
    %13 = vector.shape_cast %9 : vector<4x256xf32> to vector<1x4x256xf32>
    %cst_7 = arith.constant dense<0x7F800000> : vector<1xf32>
    %14 = vector.multi_reduction <minimumf>, %13, %cst_7 [1, 2] : vector<1x4x256xf32> to vector<1xf32>
    %15 = vector.shape_cast %14 : vector<1xf32> to vector<1x1x1xf32>
    %16 = vector.extract %15[0, 0, 0] : f32 from vector<1x1x1xf32>
    %17 = vector.shape_cast %9 : vector<4x256xf32> to vector<1x4x256xf32>
    %cst_8 = arith.constant dense<0xFF800000> : vector<1xf32>
    %18 = vector.multi_reduction <maximumf>, %17, %cst_8 [1, 2] : vector<1x4x256xf32> to vector<1xf32>
    %19 = vector.shape_cast %18 : vector<1xf32> to vector<1x1x1xf32>
    %20 = vector.extract %19[0, 0, 0] : f32 from vector<1x1x1xf32>
    %21 = tpu.iota {dimensions = array<i32: 2>} : vector<1x1x2xi32>
    %c0_i32 = arith.constant 0 : i32
    %22 = vector.broadcast %c0_i32 : i32 to vector<1x1x2xi32>
    %23 = arith.cmpi eq, %21, %22 : vector<1x1x2xi32>
    %24 = vector.broadcast %16 : f32 to vector<1x1x2xf32>
    %25 = vector.broadcast %20 : f32 to vector<1x1x2xf32>
    %26 = arith.select %23, %24, %25 : vector<1x1x2xi1>, vector<1x1x2xf32>
    %c0_9 = arith.constant 0 : index
    %c0_10 = arith.constant 0 : index
    %c0_11 = arith.constant 0 : index
    %27 = vector.load %arg3[%c0_9, %c0_10, %c0_11] : memref<1x1x2xf32, #tpu.memory_space<vmem>>, vector<1x1x2xf32>
    tpu.vector_store %arg3[%c0_9, %c0_10, %c0_11], %26 {strides = array<i32>} : memref<1x1x2xf32, #tpu.memory_space<vmem>>, vector<1x1x2xf32>,
    return
  }
  func.func @transform_0(%arg0: i32) -> (i32, i32, i32) {
    %c0_i32 = arith.constant 0 : i32
    %c0_i32_0 = arith.constant 0 : i32
    %c0_i32_1 = arith.constant 0 : i32
    return %arg0, %c0_i32, %c0_i32_0 : i32, i32, i32
  }
  func.func @transform_1(%arg0: i32) -> (i32, i32, i32) {
    %c0_i32 = arith.constant 0 : i32
    %c0_i32_0 = arith.constant 0 : i32
    %c0_i32_1 = arith.constant 0 : i32
    return %arg0, %c0_i32, %c0_i32_0 : i32, i32, i32
  }
  func.func @transform_2(%arg0: i32) -> (i32, i32, i32) {
    %c0_i32 = arith.constant 0 : i32
    %c0_i32_0 = arith.constant 0 : i32
    %c0_i32_1 = arith.constant 0 : i32
    return %arg0, %c0_i32, %c0_i32_0 : i32, i32, i32
  }
}

</mosaic_0001>

<llo_original>
// kernel: tpu_custom_call.1
$region0: #{tpu_custom_call.1}
  #allocation0 [shape = 'u32[]', space=smem, size = 0x4, offset = 0x4, fixed_abs, tag = 'smem constant byte address 0x4 - core index']
  #allocation1 [shape = 'u32[144,128]{1,0:T(1,128)}', space=vmem, size = 0x12000, scoped, tag = 'internal scratch']
  %s0 = inlined_call_operand.vmem [shape: bf16[2,256,4], index: 0, kind: input, shape index: {}]
  %s1 = inlined_call_operand.hbm [shape: f32[2,4,256], index: 1, kind: output, shape index: {0}]
  %s2 = inlined_call_operand.hbm [shape: f32[2,1,2], index: 2, kind: output, shape index: {1}]
  %3 = xla_tuple %s1, %s2
  %s4 = sld [smem:[#allocation0]]
  $region45: #{tpu_custom_call.1} parent=0
    _
  %s6 = ssub.s32 1, %s4
  %s7 = scalar_select 0, %s6, %s4
  $region1: #{tpu_custom_call.1} parent=0
    #allocation2 [shape = 'u8[8192]{0}', space=vmem, size = 0x2000, scoped, tag = 'output window, operand 0']
    #allocation3 [shape = 's32[2]{0}', space=sflag, size = 0x8, scoped, tag = 'scoped memory for tpu_custom_call.1']
    #allocation4 [shape = 'u8[1024]{0}', space=vmem, size = 0x400, scoped, tag = 'output window, operand 1']
    #allocation5 [shape = 's32[2]{0}', space=sflag, size = 0x8, scoped, tag = 'scoped memory for tpu_custom_call.1']
    %8 = vsyncpa [#allocation3], 0
    %s9 = scalar_lea.sflag [#allocation3], 1
    %10 = vsyncpa %s9, 0
    %11 = vsyncpa [#allocation5], 0
    %s12 = scalar_lea.sflag [#allocation5], 1
    %13 = vsyncpa %s12, 0
    loop: start=0, step=1, limit=4
    $region2: #{tpu_custom_call.1} parent=1 // loop_pre_header
      _
    $region3: #{tpu_custom_call.1} parent=1 // loop_header
      %s15 = sphi 0, %s19
      %p16 = scmp.ge.s32.totalorder %s15, 4
      %s25 = sphi 0, %s27
      %s28 = sphi 0, %s25
      %s29 = sphi 0, %s28
      %s45 = sphi 0, %s29
      %s51 = sphi 0, %s53
      %s54 = sphi 0, %s51
      %s55 = sphi 0, %s54
      %s71 = sphi 0, %s55
      %s77 = sphi 0, %s79
      %s80 = sphi 0, %s77
      %s81 = sphi 0, %s80
      %s97 = sphi 0, %s81
    $region4: #{tpu_custom_call.1} parent=1 // loop_header_branch
      %18 = sbr.rel (%p16) target = $region8
    $region5: #{tpu_custom_call.1} parent=1 // loop_body
      %s20 = ssub.s32 %s15, 1
      %s21 = ssub.s32 %s15, 2
      %s22 = sadd.s32 %s15, 1
      %s23 = ssub.s32 %s15, %s22
      %p24 = scmp.eq.s32.totalorder %s23, 0
      %s26 = sadd.s32 %s25, 1
      %s27 = scalar_select %p24, %s25, %s26
      %p30 = pneg %p24
      %p31 = scmp.eq.s32.totalorder %s15, 1
      %p32 = por %p30, %p31
      %p33 = scmp.ne.s32.totalorder %s25, %s28
      %p34 = scmp.eq.s32.totalorder %s15, 0
      %p35 = por %p33, %p34
      %p36 = scmp.ne.s32.totalorder %s25, %s28
      %p37 = scmp.eq.s32.totalorder %s20, 1
      %p38 = por %p36, %p37
      %p39 = scmp.ne.s32.totalorder %s28, %s29
      %p40 = scmp.eq.s32.totalorder %s20, 0
      %p41 = por %p39, %p40
      %p42 = scmp.ne.s32.totalorder %s28, %s29
      %p43 = scmp.eq.s32.totalorder %s21, 1
      %p44 = por %p42, %p43
      %p46 = scmp.ne.s32.totalorder %s29, %s45
      %p47 = scmp.eq.s32.totalorder %s21, 0
      %p48 = por %p46, %p47
      %s49 = ssub.s32 %s15, %s22
      %p50 = scmp.eq.s32.totalorder %s49, 0
      %s52 = sadd.s32 %s51, 1
      %s53 = scalar_select %p50, %s51, %s52
      %p56 = pneg %p50
      %p57 = scmp.eq.s32.totalorder %s15, 1
      %p58 = por %p56, %p57
      %p59 = scmp.ne.s32.totalorder %s51, %s54
      %p60 = scmp.eq.s32.totalorder %s15, 0
      %p61 = por %p59, %p60
      %p62 = scmp.ne.s32.totalorder %s51, %s54
      %p63 = scmp.eq.s32.totalorder %s20, 1
      %p64 = por %p62, %p63
      %p65 = scmp.ne.s32.totalorder %s54, %s55
      %p66 = scmp.eq.s32.totalorder %s20, 0
      %p67 = por %p65, %p66
      %p68 = scmp.ne.s32.totalorder %s54, %s55
      %p69 = scmp.eq.s32.totalorder %s21, 1
      %p70 = por %p68, %p69
      %p72 = scmp.ne.s32.totalorder %s55, %s71
      %p73 = scmp.eq.s32.totalorder %s21, 0
      %p74 = por %p72, %p73
      %s75 = ssub.s32 %s15, %s22
      %p76 = scmp.eq.s32.totalorder %s75, 0
      %s78 = sadd.s32 %s77, 1
      %s79 = scalar_select %p76, %s77, %s78
      %p82 = pneg %p76
      %p83 = scmp.eq.s32.totalorder %s15, 1
      %p84 = por %p82, %p83
      %p85 = scmp.ne.s32.totalorder %s77, %s80
      %p86 = scmp.eq.s32.totalorder %s15, 0
      %p87 = por %p85, %p86
      %p88 = scmp.ne.s32.totalorder %s77, %s80
      %p89 = scmp.eq.s32.totalorder %s20, 1
      %p90 = por %p88, %p89
      %p91 = scmp.ne.s32.totalorder %s80, %s81
      %p92 = scmp.eq.s32.totalorder %s20, 0
      %p93 = por %p91, %p92
      %p94 = scmp.ne.s32.totalorder %s80, %s81
      %p95 = scmp.eq.s32.totalorder %s21, 1
      %p96 = por %p94, %p95
      %p98 = scmp.ne.s32.totalorder %s81, %s97
      %p99 = scmp.eq.s32.totalorder %s21, 0
      %p100 = por %p98, %p99
      %p101 = scmp.le.s32.totalorder 1, %s15
      %p102 = scmp.lt.s32.totalorder %s15, 3
      %p103 = pnand %p101, %p102
      %p104 = pneg %p103
      // Predicated region
      $region9: #{tpu_custom_call.1} parent=5 // pred_check
        _
      $region10: #{tpu_custom_call.1} parent=5 // pred_check_branch
        %106 = sbr.rel (%p103) target = $region12
      $region11: #{tpu_custom_call.1} parent=5 // pred_region
        %s107 = ssub.s32 %s15, 1
      $region12: #{tpu_custom_call.1} parent=5 // pred_fallthru
        _
      %p108 = scmp.lt.s32.totalorder %s15, 2
      // Predicated region
      $region13: #{tpu_custom_call.1} parent=5 // pred_check
        %p109 = pneg %p108
      $region14: #{tpu_custom_call.1} parent=5 // pred_check_branch
        %111 = sbr.rel (%p109) target = $region16
      $region15: #{tpu_custom_call.1} parent=5 // pred_region
        // Predicated region
        $region17: #{tpu_custom_call.1} parent=15 // pred_check
          %p112 = pneg %p35
        $region18: #{tpu_custom_call.1} parent=15 // pred_check_branch
          %114 = sbr.rel (%p112) target = $region20
        $region19: #{tpu_custom_call.1} parent=15 // pred_region
          %p115 = scmp.lt.s32.totalorder %s15, 1
          %s116 = scalar_select %p115, %s15, 1
          %s117 = smul.addr %s116, 32
          %s118 = smul.addr %s117, 4
          %s119 = scalar_lea.vmem %s0, %s118
        $region20: #{tpu_custom_call.1} parent=15 // pred_fallthru
          _
      $region16: #{tpu_custom_call.1} parent=5 // pred_fallthru
        _
      %p120 = scmp.le.s32.totalorder 1, %s15
      %p121 = scmp.lt.s32.totalorder %s15, 3
      %p122 = pnand %p120, %p121
      %p123 = pneg %p122
      // Predicated region
      $region21: #{tpu_custom_call.1} parent=5 // pred_check
        _
      $region22: #{tpu_custom_call.1} parent=5 // pred_check_branch
        %125 = sbr.rel (%p122) target = $region24
      $region23: #{tpu_custom_call.1} parent=5 // pred_region
        %s126 = ssub.s32 %s15, 1
        %p127 = scmp.lt.s32.totalorder %s20, 1
        %s128 = scalar_select %p127, %s20, 1
        %s129 = smul.addr %s128, 32
        %s130 = smul.addr %s129, 4
        %s131 = scalar_lea.vmem %s0, %s130
        %p132 = pneg %p41
        %p133 = pneg %p38
        %p134 = pneg %p67
        %p135 = pneg %p64
        %s136 = sand.u32 %s54, 1
        %s137 = scalar_lea.sflag [#allocation3], %s136
        %s138 = sand.u32 %s54, 1
        %s139 = smul.addr %s138, 8
        %s140 = scalar_lea.vmem [#allocation2], %s139
        %p141 = pneg %p93
        %p142 = pneg %p90
        %s143 = sand.u32 %s80, 1
        %s144 = scalar_lea.sflag [#allocation5], %s143
        %s145 = sand.u32 %s80, 1
        %s146 = scalar_lea.vmem [#allocation4], %s145
        %p147 = scmp.lt.s32.totalorder %s20, 1
        %s148 = scalar_select %p147, %s20, 1
        %s149 = smul.addr %s148, 32
        %s150 = smul.addr %s149, 4
        %s151 = scalar_lea.vmem %s0, %s150
        %v153 = vld [vmem:[%s151] sm:$0xf]
        %v154 = vld [vmem:[%s151 + $0x4] sm:$0xf]
        %v155 = vld [vmem:[%s151 + $0x8] sm:$0xf]
        %v156 = vld [vmem:[%s151 + $0xc] sm:$0xf]
        %v157 = vld [vmem:[%s151 + $0x10] sm:$0xf]
        %v158 = vld [vmem:[%s151 + $0x14] sm:$0xf]
        %v159 = vld [vmem:[%s151 + $0x18] sm:$0xf]
        %v160 = vld [vmem:[%s151 + $0x1c] sm:$0xf]
        %v161 = vld [vmem:[%s151 + $0x20] sm:$0xf]
        %v162 = vld [vmem:[%s151 + $0x24] sm:$0xf]
        %v163 = vld [vmem:[%s151 + $0x28] sm:$0xf]
        %v164 = vld [vmem:[%s151 + $0x2c] sm:$0xf]
        %v165 = vld [vmem:[%s151 + $0x30] sm:$0xf]
        %v166 = vld [vmem:[%s151 + $0x34] sm:$0xf]
        %v167 = vld [vmem:[%s151 + $0x38] sm:$0xf]
        %v168 = vld [vmem:[%s151 + $0x3c] sm:$0xf]
        %v169 = vld [vmem:[%s151 + $0x40] sm:$0xf]
        %v170 = vld [vmem:[%s151 + $0x44] sm:$0xf]
        %v171 = vld [vmem:[%s151 + $0x48] sm:$0xf]
        %v172 = vld [vmem:[%s151 + $0x4c] sm:$0xf]
        %v173 = vld [vmem:[%s151 + $0x50] sm:$0xf]
        %v174 = vld [vmem:[%s151 + $0x54] sm:$0xf]
        %v175 = vld [vmem:[%s151 + $0x58] sm:$0xf]
        %v176 = vld [vmem:[%s151 + $0x5c] sm:$0xf]
        %v177 = vld [vmem:[%s151 + $0x60] sm:$0xf]
        %v178 = vld [vmem:[%s151 + $0x64] sm:$0xf]
        %v179 = vld [vmem:[%s151 + $0x68] sm:$0xf]
        %v180 = vld [vmem:[%s151 + $0x6c] sm:$0xf]
        %v181 = vld [vmem:[%s151 + $0x70] sm:$0xf]
        %v182 = vld [vmem:[%s151 + $0x74] sm:$0xf]
        %v183 = vld [vmem:[%s151 + $0x78] sm:$0xf]
        %v184 = vld [vmem:[%s151 + $0x7c] sm:$0xf]
        %v185 = vlaneseq
        %v186 = vshrl.u32 %v185, 7
        %v187 = vlaneseq
        %v188 = vand.u32 %v187, 127
        %vm189 = vcmp.eq.s32.totalorder %v186, %v188
        %v190 = vsel %vm189, 1.0, 0.0
        %v191 = vpack.c.bf16 %v190, %v190
        %v224 = vunpack.c.l.b16 %v153
        %v225 = vunpack.c.l.b16 %v154
        %v226 = vunpack.c.l.b16 %v155
        %v227 = vunpack.c.l.b16 %v156
        %v228 = vunpack.c.l.b16 %v157
        %v229 = vunpack.c.l.b16 %v158
        %v230 = vunpack.c.l.b16 %v159
        %v231 = vunpack.c.l.b16 %v160
        %v232 = vunpack.c.l.b16 %v161
        %v233 = vunpack.c.l.b16 %v162
        %v234 = vunpack.c.l.b16 %v163
        %v235 = vunpack.c.l.b16 %v164
        %v236 = vunpack.c.l.b16 %v165
        %v237 = vunpack.c.l.b16 %v166
        %v238 = vunpack.c.l.b16 %v167
        %v239 = vunpack.c.l.b16 %v168
        %v240 = vunpack.c.l.b16 %v169
        %v241 = vunpack.c.l.b16 %v170
        %v242 = vunpack.c.l.b16 %v171
        %v243 = vunpack.c.l.b16 %v172
        %v244 = vunpack.c.l.b16 %v173
        %v245 = vunpack.c.l.b16 %v174
        %v246 = vunpack.c.l.b16 %v175
        %v247 = vunpack.c.l.b16 %v176
        %v248 = vunpack.c.l.b16 %v177
        %v249 = vunpack.c.l.b16 %v178
        %v250 = vunpack.c.l.b16 %v179
        %v251 = vunpack.c.l.b16 %v180
        %v252 = vunpack.c.l.b16 %v181
        %v253 = vunpack.c.l.b16 %v182
        %v254 = vunpack.c.l.b16 %v183
        %v255 = vunpack.c.l.b16 %v184
        %v256 = vpack.c.b16 %v225, %v224
        %v257 = vpack.c.b16 %v227, %v226
        %v258 = vpack.c.b16 %v229, %v228
        %v259 = vpack.c.b16 %v231, %v230
        %v260 = vpack.c.b16 %v233, %v232
        %v261 = vpack.c.b16 %v235, %v234
        %v262 = vpack.c.b16 %v237, %v236
        %v263 = vpack.c.b16 %v239, %v238
        %v264 = vpack.c.b16 %v241, %v240
        %v265 = vpack.c.b16 %v243, %v242
        %v266 = vpack.c.b16 %v245, %v244
        %v267 = vpack.c.b16 %v247, %v246
        %v268 = vpack.c.b16 %v249, %v248
        %v269 = vpack.c.b16 %v251, %v250
        %v270 = vpack.c.b16 %v253, %v252
        %v271 = vpack.c.b16 %v255, %v254
        %vm272 = vcmask 31744
        %v274 = vsel %vm272, %v191, 0
        %v277 = vsel %vm272, %v256, 0
        %v280 = vsel %vm272, %v257, 0
        %v283 = vsel %vm272, %v258, 0
        %v286 = vsel %vm272, %v259, 0
        %v289 = vsel %vm272, %v260, 0
        %v292 = vsel %vm272, %v261, 0
        %v295 = vsel %vm272, %v262, 0
        %v298 = vsel %vm272, %v263, 0
        %v301 = vsel %vm272, %v264, 0
        %v304 = vsel %vm272, %v265, 0
        %v307 = vsel %vm272, %v266, 0
        %v310 = vsel %vm272, %v267, 0
        %v313 = vsel %vm272, %v268, 0
        %v316 = vsel %vm272, %v269, 0
        %v319 = vsel %vm272, %v270, 0
        %v322 = vsel %vm272, %v271, 0
        %324 = vmatprep.subr.bf16.mxu0 0
        %325 = vmatpush1.bf16.xpose.msra.mxu0 %v277
        %326 = vmatprep.subr.bf16.mxu0 0
        %327 = vmatpush1.bf16.xpose.msra.mxu0 %v280
        %328 = vmatprep.subr.bf16.mxu0 0
        %329 = vmatpush1.bf16.xpose.msra.mxu0 %v283
        %330 = vmatprep.subr.bf16.mxu0 0
        %331 = vmatpush1.bf16.xpose.msra.mxu0 %v286
        %332 = vmatprep.subr.bf16.mxu0 0
        %333 = vmatpush1.bf16.xpose.msra.mxu0 %v289
        %334 = vmatprep.subr.bf16.mxu0 0
        %335 = vmatpush1.bf16.xpose.msra.mxu0 %v292
        %336 = vmatprep.subr.bf16.mxu0 0
        %337 = vmatpush1.bf16.xpose.msra.mxu0 %v295
        %338 = vmatprep.subr.bf16.mxu0 0
        %339 = vmatpush1.bf16.xpose.msra.mxu0 %v298
        %340 = vmatprep.subr.bf16.mxu0 0
        %341 = vmatpush1.bf16.xpose.msra.mxu0 %v301
        %342 = vmatprep.subr.bf16.mxu0 0
        %343 = vmatpush1.bf16.xpose.msra.mxu0 %v304
        %344 = vmatprep.subr.bf16.mxu0 0
        %345 = vmatpush1.bf16.xpose.msra.mxu0 %v307
        %346 = vmatprep.subr.bf16.mxu0 0
        %347 = vmatpush1.bf16.xpose.msra.mxu0 %v310
        %348 = vmatprep.subr.bf16.mxu0 0
        %349 = vmatpush1.bf16.xpose.msra.mxu0 %v313
        %350 = vmatprep.subr.bf16.mxu0 0
        %351 = vmatpush1.bf16.xpose.msra.mxu0 %v316
        %352 = vmatprep.subr.bf16.mxu0 0
        %353 = vmatpush1.bf16.xpose.msra.mxu0 %v319
        %354 = vmatprep.subr.bf16.mxu0 0
        %355 = vmatpush1.bf16.xpose.msra.mxu0 %v322
        %356 = vmatprep.mubr.bf16.mxu0 0
        %357 = vmatmul.mubr.bf16.gmra.mrb[0].mxu0 %v274
        %v358 = vpop.f32.mrb[0].mxu0
        %v359 = vadd.f32 0.0, %v358
        %v360 = vpop.f32.mrb[0].mxu0
        %v361 = vadd.f32 0.0, %v360
        %v362 = vpop.f32.mrb[0].mxu0
        %v363 = vpop.f32.mrb[0].mxu0
        %364 = vdwg.mxu0
        %v367 = vcombine.low %v359, %v361
        %369 = vst [vmem:[%s140] sm:$0xff] %v367
        %vm370 = vcmask 1043456
        %v371 = vsel %vm370, %v359, inf
        %v372 = vsel %vm370, %v361, inf
        %v373 = vmin.f32 %v371, %v372
        %374 = vmin.xlane.f32.xlu0 %v373
        %v375 = vpop.xlane.xlu0 %374
        %v376 = vrot.slane %v375, 4
        %v377 = vmin.f32 %v375, %v376
        %v378 = vrot.slane %v377, 2
        %v379 = vmin.f32 %v377, %v378
        %v380 = vrot.slane %v379, 1
        %v381 = vmin.f32 %v379, %v380
        %s382 = vtos %v381
        %v383 = vsel %vm370, %v359, -inf
        %v384 = vsel %vm370, %v361, -inf
        %v385 = vmax.f32 %v383, %v384
        %386 = vmax.xlane.f32.xlu0 %v385
        %v387 = vpop.xlane.xlu0 %386
        %v388 = vrot.slane %v387, 4
        %v389 = vmax.f32 %v387, %v388
        %v390 = vrot.slane %v389, 2
        %v391 = vmax.f32 %v389, %v390
        %v392 = vrot.slane %v391, 1
        %v393 = vmax.f32 %v391, %v392
        %s394 = vtos %v393
        %vm395 = vcmp.eq.s32.totalorder %v188, 0
        %v396 = vstv %s382
        %v397 = vstv %s394
        %v398 = vsel %vm395, %v396, %v397
        %vm399 = vcmask 8192
        %400 = vst.msk [vmem:[%s146] sm:$0x1] %vm399, %v398
        %s401 = sand.u32 %s54, 1
        %s402 = scalar_lea.sflag [#allocation3], %s401
        %s403 = sand.u32 %s54, 1
        %s404 = smul.addr %s403, 8
        %s405 = scalar_lea.vmem [#allocation2], %s404
        %s406 = sand.u32 %s80, 1
        %s407 = scalar_lea.sflag [#allocation5], %s406
        %s408 = sand.u32 %s80, 1
        %s409 = scalar_lea.vmem [#allocation4], %s408
        // Predicated region
        $region25: #{tpu_custom_call.1} parent=23 // pred_check
          %p410 = pneg %p64
        $region26: #{tpu_custom_call.1} parent=23 // pred_check_branch
          %412 = sbr.rel (%p410) target = $region28
        $region27: #{tpu_custom_call.1} parent=23 // pred_region
          %s414 = ssub.s32 128, 128
          %415 = vsyncadd %s402, %s414
          %s416 = smul.addr %s20, 2
          %s417 = smul.addr %s416, 64
          %s418 = scalar_lea.hbm %s1, %s417
          %s420 = sshll.u32 %s405, 4
          %s421 = int_to_ptr.vmem [resolvable:$true] %s420
          %423 = dma.vmem_to_hbm [thread:$0]  %s421, 128, %s418, %s402
        $region28: #{tpu_custom_call.1} parent=23 // pred_fallthru
          _
        // Predicated region
        $region29: #{tpu_custom_call.1} parent=23 // pred_check
          %p424 = pneg %p90
        $region30: #{tpu_custom_call.1} parent=23 // pred_check_branch
          %426 = sbr.rel (%p424) target = $region32
        $region31: #{tpu_custom_call.1} parent=23 // pred_region
          %s428 = ssub.s32 16, 16
          %429 = vsyncadd %s407, %s428
          %s430 = smul.addr %s20, 16
          %s431 = scalar_lea.hbm %s2, %s430
          %s433 = sshll.u32 %s409, 4
          %s434 = int_to_ptr.vmem [resolvable:$true] %s433
          %436 = dma.vmem_to_hbm [thread:$0]  %s434, 16, %s431, %s407
        $region32: #{tpu_custom_call.1} parent=23 // pred_fallthru
          _
      $region24: #{tpu_custom_call.1} parent=5 // pred_fallthru
        _
      %p437 = scmp.le.s32.totalorder 2, %s15
      // Predicated region
      $region33: #{tpu_custom_call.1} parent=5 // pred_check
        %p438 = pneg %p437
      $region34: #{tpu_custom_call.1} parent=5 // pred_check_branch
        %440 = sbr.rel (%p438) target = $region36
      $region35: #{tpu_custom_call.1} parent=5 // pred_region
        %s441 = ssub.s32 %s15, 2
        // Predicated region
        $region37: #{tpu_custom_call.1} parent=35 // pred_check
          %p442 = pneg %p70
        $region38: #{tpu_custom_call.1} parent=35 // pred_check_branch
          %444 = sbr.rel (%p442) target = $region40
        $region39: #{tpu_custom_call.1} parent=35 // pred_region
          %s445 = sand.u32 %s55, 1
          %s446 = scalar_lea.sflag [#allocation3], %s445
          %s447 = sand.u32 %s55, 1
          %s448 = smul.addr %s447, 8
          %s449 = scalar_lea.vmem [#allocation2], %s448
          %450 = dma.done %s446, 128
        $region40: #{tpu_custom_call.1} parent=35 // pred_fallthru
          _
        // Predicated region
        $region41: #{tpu_custom_call.1} parent=35 // pred_check
          %p451 = pneg %p96
        $region42: #{tpu_custom_call.1} parent=35 // pred_check_branch
          %453 = sbr.rel (%p451) target = $region44
        $region43: #{tpu_custom_call.1} parent=35 // pred_region
          %s454 = sand.u32 %s81, 1
          %s455 = scalar_lea.sflag [#allocation5], %s454
          %s456 = sand.u32 %s81, 1
          %s457 = scalar_lea.vmem [#allocation4], %s456
          %458 = dma.done %s455, 16
        $region44: #{tpu_custom_call.1} parent=35 // pred_fallthru
          _
      $region36: #{tpu_custom_call.1} parent=5 // pred_fallthru
        _
    $region6: #{tpu_custom_call.1} parent=1 // loop_footer
      %s19 = sadd.s32 1, %s15
    $region7: #{tpu_custom_call.1} parent=1 // loop_footer_branch
      %14 = sbr.rel target = $region3
    $region8: #{tpu_custom_call.1} parent=1 // loop_exit
      _
    %459 = vsyncpa [#allocation3], 1
    %s460 = scalar_lea.sflag [#allocation3], 1
    %461 = vsyncpa %s460, 1
    %462 = vsyncpa [#allocation5], 1
    %s463 = scalar_lea.sflag [#allocation5], 1
    %464 = vsyncpa %s463, 1

</llo_original>
